<compile_context>
chip_gen: v7x
topology: tpu7x:2x2x1
jax: 0.10.0
libtpu: 0.0.40
codegen_flags: <defaults>
</compile_context>

<pallas_src>
import jax
import jax.numpy as jnp
from jax import lax
from jax.experimental import pallas as pl
from jax.experimental.pallas import tpu as pltpu


# ----------------------------------------------------------------------------
# Pallas kernel: fused fc1 -> BatchNorm(train) -> ReLU -> fc2 (+ bias)
# ----------------------------------------------------------------------------
def _mlp_bn_fwd_kernel(embed_ref, w1t_ref, w2t_ref, params_ref, o_ref):
    # embed_ref : [C, E]
    # w1t_ref   : [E, W]   (fc1 weight, pre-transposed at init -> lane-dense RHS)
    # w2t_ref   : [W, W]   (fc2 weight, pre-transposed / K-major at init)
    # params_ref: [3, W]   rows: 0 = bn gamma, 1 = bn beta, 2 = fc2 bias
    # fc1 bias intentionally omitted: training-mode BN subtracts the per-feature
    # batch mean, which cancels a constant per-feature bias (up to float ULPs).
    x = jnp.dot(embed_ref[...], w1t_ref[...],
                preferred_element_type=jnp.float32)            # [C, W], f32

    # BatchNorm1d training mode: stats over the class (row) axis, biased var,
    # eps = 1e-5.  Compute xc once and reuse it for variance + normalization.
    inv_c = 1.0 / x.shape[0]
    mean = jnp.sum(x, axis=0, keepdims=True) * inv_c           # [1, W]
    xc = x - mean                                              # [C, W]
    var = jnp.sum(xc * xc, axis=0, keepdims=True) * inv_c      # [1, W]

    gamma = params_ref[0:1, :]
    beta = params_ref[1:2, :]
    b2 = params_ref[2:3, :]

    # Fold gamma into the inverse-stddev scale BEFORE broadcasting: [1, W] mul
    # instead of a full [C, W] mul.
    s = gamma * lax.rsqrt(var + 1e-5)                          # [1, W]
    xn = jnp.maximum(xc * s + beta, 0.0)                       # BN + ReLU

    o_ref[...] = (jnp.dot(xn, w2t_ref[...],
                          preferred_element_type=jnp.float32) + b2
                  ).astype(o_ref.dtype)


# ----------------------------------------------------------------------------
# One-time parameter preparation (init-time layout work; NOT per forward call)
# ----------------------------------------------------------------------------
def prepare_mlp_params(fc1_w, fc1_b, bn_gamma, bn_beta, fc2_w, fc2_b):
    """Convert PyTorch-layout parameters into the kernel's fused layout.

    fc1_w: [W, E], fc2_w: [W, W] (PyTorch [out, in]); bn_*/fc2_b: [W].
    Returns (fc1_wT [E, W], fc2_wT [W, W] K-major, params [3, W]).
    fc1_b is accepted for interface parity but dropped: the training-mode BN
    mean subtraction cancels it (exactly in real arithmetic, to ULPs in float).
    """
    del fc1_b
    fc1_wT = jnp.asarray(fc1_w).T                    # [E, W], lane-dense RHS
    fc2_wT = jnp.asarray(fc2_w).T                    # [W, W], K-major
    params = jnp.stack([bn_gamma, bn_beta, fc2_b], axis=0)     # [3, W]
    return fc1_wT, fc2_wT, params


# ----------------------------------------------------------------------------
# Forward wrappers
# ----------------------------------------------------------------------------
def _vmem_spec():
    # Whole-array block (no grid), resident in VMEM.
    return pl.BlockSpec(memory_space=pltpu.MemorySpace.VMEM)


def embed2class_forward_linear(embed_w, fc_w):
    """linear == True branch: x = embed.weight @ fc.weight.T (bias=False).

    Intentionally NOT a Pallas call: a single small matmul gains nothing from
    Pallas fusion; a custom call would only add fixed overhead and block XLA
    from fusing with neighboring ops (e.g. classify())."""
    return jnp.dot(embed_w, fc_w.T, preferred_element_type=embed_w.dtype)


def embed2class_forward_mlp(embed_w, fc1_wT, fc2_wT, params):
    """linear == False branch (fused Pallas kernel).

    embed_w: [C, E]; fc1_wT: [E, W]; fc2_wT: [W, W]; params: [3, W]
    (all produced once at init by prepare_mlp_params)."""
    C, E = embed_w.shape
    W = fc1_wT.shape[1]
    cost = pl.CostEstimate(
        flops=2 * C * E * W + 2 * C * W * W + 6 * C * W,
        transcendentals=W,                                     # rsqrt per feature
        bytes_accessed=4 * (C * E + E * W + W * W + 3 * W + C * W),
    )
    return pl.pallas_call(
        _mlp_bn_fwd_kernel,
        out_shape=jax.ShapeDtypeStruct((C, W), embed_w.dtype),
        in_specs=[_vmem_spec(), _vmem_spec(), _vmem_spec(), _vmem_spec()],
        out_specs=_vmem_spec(),
        cost_estimate=cost,
    )(embed_w, fc1_wT, fc2_wT, params)


# ----------------------------------------------------------------------------
# Pure-JAX references (PyTorch layout; include fc1 bias to validate the
# dropped-bias equivalence at tolerance)
# ----------------------------------------------------------------------------
def _ref_linear(embed_w, fc_w):
    return embed_w @ fc_w.T


def _ref_mlp(embed_w, fc1_w, fc1_b, g, b, fc2_w, fc2_b):
    x = embed_w @ fc1_w.T + fc1_b
    mean = jnp.mean(x, axis=0, keepdims=True)
    var = jnp.mean((x - mean) ** 2, axis=0, keepdims=True)
    x = (x - mean) / jnp.sqrt(var + 1e-5) * g + b
    x = jnp.maximum(x, 0.0)
    return x @ fc2_w.T + fc2_b


# ----------------------------------------------------------------------------
# Main
# ----------------------------------------------------------------------------
def _run_case(key, num_classes, embed_dims, weights_dim):
    k = jax.random.split(key, 6)

    # Deterministic synthetic parameters (module __init__ shapes; no checkpoint).
    embed_w = jax.random.normal(k[0], (num_classes, embed_dims), jnp.float32)
    fc_w    = jax.random.normal(k[1], (weights_dim, embed_dims), jnp.float32) * 0.05
    fc1_w   = jax.random.normal(k[2], (weights_dim, embed_dims), jnp.float32) * 0.05
    fc1_b   = jax.random.normal(k[3], (weights_dim,), jnp.float32) * 0.05
    fc2_w   = jax.random.normal(k[4], (weights_dim, weights_dim), jnp.float32) * 0.05
    fc2_b   = jax.random.normal(k[5], (weights_dim,), jnp.float32) * 0.05
    bn_gamma = jnp.ones((weights_dim,), jnp.float32)   # PyTorch BN default init
    bn_beta  = jnp.zeros((weights_dim,), jnp.float32)
    # (self.kappa is only used in classify(), not in forward(); not needed here.)

    # linear == True branch (plain XLA matmul, see wrapper comment).
    out_lin = jax.block_until_ready(embed2class_forward_linear(embed_w, fc_w))
    ref_lin = _ref_linear(embed_w, fc_w)
    assert out_lin.shape == (num_classes, weights_dim)
    assert jnp.allclose(out_lin, ref_lin, atol=1e-4, rtol=1e-4)

    # linear == False branch: one-time init-side layout work, then fused kernel.
    fc1_wT, fc2_wT, params = prepare_mlp_params(
        fc1_w, fc1_b, bn_gamma, bn_beta, fc2_w, fc2_b)
    out_mlp = jax.block_until_ready(
        embed2class_forward_mlp(embed_w, fc1_wT, fc2_wT, params))
    ref_mlp = _ref_mlp(embed_w, fc1_w, fc1_b, bn_gamma, bn_beta, fc2_w, fc2_b)
    assert out_mlp.shape == (num_classes, weights_dim)
    assert jnp.allclose(out_mlp, ref_mlp, atol=1e-4, rtol=1e-4)


if __name__ == "__main__":
    embed_dims = 64     # const.embed_dims
    weights_dim = 128   # const.weights_dim

    key = jax.random.PRNGKey(0)
    k_small, k_real = jax.random.split(key)

    # Small case.
    _run_case(k_small, num_classes=32, embed_dims=embed_dims,
              weights_dim=weights_dim)
    # Real CIFAR-100 case: C=100 is not a multiple of 8 sublanes — verifies
    # that the masked axis-0 reductions (BN stats) still match the reference.
    _run_case(k_real, num_classes=100, embed_dims=embed_dims,
              weights_dim=weights_dim)

    print("KERNEL_OK")
</pallas_src>

<mosaic_0001>
module attributes {stable_mosaic.version = 11 : i64} {
  func.func @_mlp_bn_fwd_kernel(%arg0: memref<32x64xf32, #tpu.memory_space<vmem>>, %arg1: memref<64x128xf32, #tpu.memory_space<vmem>>, %arg2: memref<128x128xf32, #tpu.memory_space<vmem>>, %arg3: memref<3x128xf32, #tpu.memory_space<vmem>>, %arg4: memref<32x128xf32, #tpu.memory_space<vmem>>) attributes {dimension_semantics = [], scalar_prefetch = 0 : i64, scratch_operands = 0 : i64, tpu.core_type = #tpu.core_type<tc>} {
    %c0 = arith.constant 0 : index
    %c0_0 = arith.constant 0 : index
    %0 = vector.load %arg0[%c0, %c0_0] : memref<32x64xf32, #tpu.memory_space<vmem>>, vector<32x64xf32>
    %c0_1 = arith.constant 0 : index
    %c0_2 = arith.constant 0 : index
    %1 = vector.load %arg1[%c0_1, %c0_2] : memref<64x128xf32, #tpu.memory_space<vmem>>, vector<64x128xf32>
    %cst = arith.constant dense<0.000000e+00> : vector<32x128xf32>
    %2 = tpu.matmul %0, %1, %cst {dimension_numbers = #tpu.dot_dimension_numbers<[1], [0], [0], [1], [0, 0, 1, 1], [], []>} : vector<32x64xf32>, vector<64x128xf32>, vector<32x128xf32> -> vector<32x128xf32>
    %cst_3 = arith.constant dense<0.000000e+00> : vector<128xf32>
    %3 = vector.multi_reduction <add>, %2, %cst_3 [0] : vector<32x128xf32> to vector<128xf32>
    %4 = vector.shape_cast %3 : vector<128xf32> to vector<1x128xf32>
    %cst_4 = arith.constant 3.125000e-02 : f32
    %5 = vector.broadcast %cst_4 : f32 to vector<1x128xf32>
    %6 = arith.mulf %4, %5 : vector<1x128xf32>
    %7 = vector.broadcast %6 : vector<1x128xf32> to vector<32x128xf32>
    %8 = arith.subf %2, %7 : vector<32x128xf32>
    %9 = arith.mulf %8, %8 : vector<32x128xf32>
    %cst_5 = arith.constant dense<0.000000e+00> : vector<128xf32>
    %10 = vector.multi_reduction <add>, %9, %cst_5 [0] : vector<32x128xf32> to vector<128xf32>
    %11 = vector.shape_cast %10 : vector<128xf32> to vector<1x128xf32>
    %cst_6 = arith.constant 3.125000e-02 : f32
    %12 = vector.broadcast %cst_6 : f32 to vector<1x128xf32>
    %13 = arith.mulf %11, %12 : vector<1x128xf32>
    %c0_7 = arith.constant 0 : index
    %c0_8 = arith.constant 0 : index
    %14 = vector.load %arg3[%c0_7, %c0_8] : memref<3x128xf32, #tpu.memory_space<vmem>>, vector<1x128xf32>
    %c1 = arith.constant 1 : index
    %c0_9 = arith.constant 0 : index
    %15 = vector.load %arg3[%c1, %c0_9] : memref<3x128xf32, #tpu.memory_space<vmem>>, vector<1x128xf32>
    %c2 = arith.constant 2 : index
    %c0_10 = arith.constant 0 : index
    %16 = vector.load %arg3[%c2, %c0_10] : memref<3x128xf32, #tpu.memory_space<vmem>>, vector<1x128xf32>
    %cst_11 = arith.constant 9.99999974E-6 : f32
    %17 = vector.broadcast %cst_11 : f32 to vector<1x128xf32>
    %18 = arith.addf %13, %17 : vector<1x128xf32>
    %19 = math.rsqrt %18 : vector<1x128xf32>
    %20 = arith.mulf %14, %19 : vector<1x128xf32>
    %21 = vector.broadcast %20 : vector<1x128xf32> to vector<32x128xf32>
    %22 = arith.mulf %8, %21 : vector<32x128xf32>
    %23 = vector.broadcast %15 : vector<1x128xf32> to vector<32x128xf32>
    %24 = arith.addf %22, %23 : vector<32x128xf32>
    %cst_12 = arith.constant 0.000000e+00 : f32
    %25 = vector.broadcast %cst_12 : f32 to vector<32x128xf32>
    %26 = arith.maximumf %24, %25 : vector<32x128xf32>
    %c0_13 = arith.constant 0 : index
    %c0_14 = arith.constant 0 : index
    %27 = vector.load %arg2[%c0_13, %c0_14] : memref<128x128xf32, #tpu.memory_space<vmem>>, vector<128x128xf32>
    %cst_15 = arith.constant dense<0.000000e+00> : vector<32x128xf32>
    %28 = tpu.matmul %26, %27, %cst_15 {dimension_numbers = #tpu.dot_dimension_numbers<[1], [0], [0], [1], [0, 0, 1, 1], [], []>} : vector<32x128xf32>, vector<128x128xf32>, vector<32x128xf32> -> vector<32x128xf32>
    %29 = vector.broadcast %16 : vector<1x128xf32> to vector<32x128xf32>
    %30 = arith.addf %28, %29 : vector<32x128xf32>
    %c0_16 = arith.constant 0 : index
    %c0_17 = arith.constant 0 : index
    %31 = vector.load %arg4[%c0_16, %c0_17] : memref<32x128xf32, #tpu.memory_space<vmem>>, vector<32x128xf32>
    tpu.vector_store %arg4[%c0_16, %c0_17], %30 {strides = array<i32>} : memref<32x128xf32, #tpu.memory_space<vmem>>, vector<32x128xf32>,
    return
  }
}

</mosaic_0001>

<llo_original>
// kernel: tpu_custom_call.1
$region0: #{tpu_custom_call.1}
  #allocation0 [shape = 'u32[]', space=smem, size = 0x4, offset = 0x4, fixed_abs, tag = 'smem constant byte address 0x4 - core index']
  #allocation1 [shape = 'u32[144,128]{1,0:T(1,128)}', space=vmem, size = 0x12000, scoped, tag = 'internal scratch']
  %s0 = inlined_call_operand.hbm [shape: f32[32,64], index: 0, kind: input, shape index: {}]
  %s1 = inlined_call_operand.hbm [shape: f32[64,128], index: 1, kind: input, shape index: {}]
  %s2 = inlined_call_operand.hbm [shape: f32[128,128], index: 2, kind: input, shape index: {}]
  %s3 = inlined_call_operand.vmem [shape: f32[3,128], index: 3, kind: input, shape index: {}]
  %s4 = inlined_call_operand.hbm [shape: f32[32,128], index: 4, kind: output, shape index: {}]
  %s5 = sld [smem:[#allocation0]]
  $region38: #{tpu_custom_call.1} parent=0
    _
  %s7 = ssub.s32 1, %s5
  %s8 = scalar_select 0, %s7, %s5
  $region1: #{tpu_custom_call.1} parent=0
    #allocation2 [shape = 'u8[16384]{0}', space=vmem, size = 0x4000, scoped, tag = 'input window, operand 0, single buffered']
    #allocation3 [shape = 's32[1]{0}', space=sflag, size = 0x4, scoped, tag = 'scoped memory for tpu_custom_call.1']
    #allocation4 [shape = 's32[1]{0}', space=sflag, size = 0x4, scoped, tag = 'scoped memory for tpu_custom_call.1']
    #allocation5 [shape = 'u8[32768]{0}', space=vmem, size = 0x8000, scoped, tag = 'input window, operand 1, single buffered']
    #allocation6 [shape = 's32[1]{0}', space=sflag, size = 0x4, scoped, tag = 'scoped memory for tpu_custom_call.1']
    #allocation7 [shape = 'u8[65536]{0}', space=vmem, size = 0x10000, scoped, tag = 'input window, operand 2, single buffered']
    #allocation8 [shape = 'u8[16384]{0}', space=vmem, size = 0x4000, scoped, tag = 'output window, operand 0, single buffered']
    %9 = vsyncpa [#allocation3], 0
    %10 = vsyncpa [#allocation6], 0
    %11 = vsyncpa [#allocation4], 0
    // Predicated region
    $region2: #{tpu_custom_call.1} parent=1 // pred_check
      _
    $region3: #{tpu_custom_call.1} parent=1 // pred_check_branch
      %13 = sbr.rel (0) target = $region5
    $region4: #{tpu_custom_call.1} parent=1 // pred_region
      %s15 = ssub.s32 512, 512
      %16 = vsyncadd [#allocation3], %s15
      %s17 = sshll.u32 [#allocation2], 4
      %s18 = int_to_ptr.vmem [resolvable:$true] %s17
      %23 = dma.hbm_to_vmem [thread:$0]  %s0, 512, %s18, [#allocation3], 128, 128, 8
    $region5: #{tpu_custom_call.1} parent=1 // pred_fallthru
      _
    // Predicated region
    $region6: #{tpu_custom_call.1} parent=1 // pred_check
      _
    $region7: #{tpu_custom_call.1} parent=1 // pred_check_branch
      %25 = sbr.rel (0) target = $region9
    $region8: #{tpu_custom_call.1} parent=1 // pred_region
      %s27 = ssub.s32 1024, 1024
      %28 = vsyncadd [#allocation6], %s27
      %s29 = sshll.u32 [#allocation5], 4
      %s30 = int_to_ptr.vmem [resolvable:$true] %s29
      %35 = dma.hbm_to_vmem [thread:$0]  %s1, 1024, %s30, [#allocation6], 128, 128, 8
    $region9: #{tpu_custom_call.1} parent=1 // pred_fallthru
      _
    // Predicated region
    $region10: #{tpu_custom_call.1} parent=1 // pred_check
      _
    $region11: #{tpu_custom_call.1} parent=1 // pred_check_branch
      %37 = sbr.rel (0) target = $region13
    $region12: #{tpu_custom_call.1} parent=1 // pred_region
      %s39 = ssub.s32 2048, 2048
      %40 = vsyncadd [#allocation6], %s39
      %s41 = sshll.u32 [#allocation7], 4
      %s42 = int_to_ptr.vmem [resolvable:$true] %s41
      %47 = dma.hbm_to_vmem [thread:$0]  %s2, 2048, %s42, [#allocation6], 128, 128, 8
    $region13: #{tpu_custom_call.1} parent=1 // pred_fallthru
      _
    // Predicated region
    $region14: #{tpu_custom_call.1} parent=1 // pred_check
      _
    $region15: #{tpu_custom_call.1} parent=1 // pred_check_branch
      %49 = sbr.rel (0) target = $region17
    $region16: #{tpu_custom_call.1} parent=1 // pred_region
      _
    $region17: #{tpu_custom_call.1} parent=1 // pred_fallthru
      _
    // Predicated region
    $region18: #{tpu_custom_call.1} parent=1 // pred_check
      _
    $region19: #{tpu_custom_call.1} parent=1 // pred_check_branch
      %51 = sbr.rel (0) target = $region21
    $region20: #{tpu_custom_call.1} parent=1 // pred_region
      %52 = dma.done [#allocation3], 512
    $region21: #{tpu_custom_call.1} parent=1 // pred_fallthru
      _
    // Predicated region
    $region22: #{tpu_custom_call.1} parent=1 // pred_check
      _
    $region23: #{tpu_custom_call.1} parent=1 // pred_check_branch
      %54 = sbr.rel (0) target = $region25
    $region24: #{tpu_custom_call.1} parent=1 // pred_region
      %55 = dma.done [#allocation6], 1024
    $region25: #{tpu_custom_call.1} parent=1 // pred_fallthru
      _
    // Predicated region
    $region26: #{tpu_custom_call.1} parent=1 // pred_check
      _
    $region27: #{tpu_custom_call.1} parent=1 // pred_check_branch
      %57 = sbr.rel (0) target = $region29
    $region28: #{tpu_custom_call.1} parent=1 // pred_region
      %58 = dma.done [#allocation6], 2048
    $region29: #{tpu_custom_call.1} parent=1 // pred_fallthru
      _
    %v59 = vld [vmem:[#allocation2] sm:$0xff]
    %v60 = vld [vmem:[#allocation2 + $0x8] sm:$0xff]
    %v61 = vld [vmem:[#allocation2 + $0x10] sm:$0xff]
    %v62 = vld [vmem:[#allocation2 + $0x18] sm:$0xff]
    %v63 = vld [vmem:[#allocation5] sm:$0xff]
    %v64 = vld [vmem:[#allocation5 + $0x8] sm:$0xff]
    %v65 = vld [vmem:[#allocation5 + $0x10] sm:$0xff]
    %v66 = vld [vmem:[#allocation5 + $0x18] sm:$0xff]
    %v67 = vld [vmem:[#allocation5 + $0x20] sm:$0xff]
    %v68 = vld [vmem:[#allocation5 + $0x28] sm:$0xff]
    %v69 = vld [vmem:[#allocation5 + $0x30] sm:$0xff]
    %v70 = vld [vmem:[#allocation5 + $0x38] sm:$0xff]
    %vm71 = vcmask 523264
    %v73 = vsel %vm71, %v59, 0
    %v76 = vsel %vm71, %v60, 0
    %v79 = vsel %vm71, %v61, 0
    %v82 = vsel %vm71, %v62, 0
    %84 = vmatprep.subr.mxu0 0.0
    %85 = vmatpush1.msra.mxu0 %v63
    %86 = vmatprep.subr.mxu0 0.0
    %87 = vmatpush1.msra.mxu0 %v64
    %88 = vmatprep.subr.mxu0 0.0
    %89 = vmatpush1.msra.mxu0 %v65
    %90 = vmatprep.subr.mxu0 0.0
    %91 = vmatpush1.msra.mxu0 %v66
    %92 = vmatprep.subr.mxu0 0.0
    %93 = vmatpush1.msra.mxu0 %v67
    %94 = vmatprep.subr.mxu0 0.0
    %95 = vmatpush1.msra.mxu0 %v68
    %96 = vmatprep.subr.mxu0 0.0
    %97 = vmatpush1.msra.mxu0 %v69
    %98 = vmatprep.subr.mxu0 0.0
    %99 = vmatpush1.msra.mxu0 %v70
    %100 = vmatprep.subr.mxu0 0.0
    %101 = vmatpush1.msra.mxu0 0.0
    %102 = vmatprep.subr.mxu0 0.0
    %103 = vmatpush1.msra.mxu0 0.0
    %104 = vmatprep.subr.mxu0 0.0
    %105 = vmatpush1.msra.mxu0 0.0
    %106 = vmatprep.subr.mxu0 0.0
    %107 = vmatpush1.msra.mxu0 0.0
    %108 = vmatprep.subr.mxu0 0.0
    %109 = vmatpush1.msra.mxu0 0.0
    %110 = vmatprep.subr.mxu0 0.0
    %111 = vmatpush1.msra.mxu0 0.0
    %112 = vmatprep.subr.mxu0 0.0
    %113 = vmatpush1.msra.mxu0 0.0
    %114 = vmatprep.subr.mxu0 0.0
    %115 = vmatpush1.msra.mxu0 0.0
    %116 = vmatprep.subr.mxu0 0.0
    %117 = vmatpush1.msra.mxu0 0.0
    %118 = vmatprep.subr.mxu0 0.0
    %119 = vmatpush1.msra.mxu0 0.0
    %120 = vmatprep.subr.mxu0 0.0
    %121 = vmatpush1.msra.mxu0 0.0
    %122 = vmatprep.subr.mxu0 0.0
    %123 = vmatpush1.msra.mxu0 0.0
    %124 = vmatprep.subr.mxu0 0.0
    %125 = vmatpush1.msra.mxu0 0.0
    %126 = vmatprep.subr.mxu0 0.0
    %127 = vmatpush1.msra.mxu0 0.0
    %128 = vmatprep.subr.mxu0 0.0
    %129 = vmatpush1.msra.mxu0 0.0
    %130 = vmatprep.subr.mxu0 0.0
    %131 = vmatpush1.msra.mxu0 0.0
    %132 = vmatprep.subr.mxu0 0.0
    %133 = vmatpush1.msra.mxu0 0.0
    %134 = vmatprep.subr.mxu0 0.0
    %135 = vmatpush1.msra.mxu0 0.0
    %136 = vmatprep.subr.mxu0 0.0
    %137 = vmatpush1.msra.mxu0 0.0
    %138 = vmatprep.subr.mxu0 0.0
    %139 = vmatpush1.msra.mxu0 0.0
    %140 = vmatprep.subr.mxu0 0.0
    %141 = vmatpush1.msra.mxu0 0.0
    %142 = vmatprep.subr.mxu0 0.0
    %143 = vmatpush1.msra.mxu0 0.0
    %144 = vmatprep.subr.mxu0 0.0
    %145 = vmatpush1.msra.mxu0 0.0
    %146 = vmatprep.subr.mxu0 0.0
    %147 = vmatpush1.msra.mxu0 0.0
    %148 = vmatprep.mubr.f32.mxu0 0.0
    %149 = vmatmul.mubr.f32.gmra.mrb[0].mxu0 %v73
    %v150 = vpop.f32.mrb[0].mxu0
    %v151 = vadd.f32 0.0, %v150
    %v152 = vpop.f32.mrb[0].mxu0
    %153 = vmatprep.mubr.f32.mxu0 0.0
    %154 = vmatmul.mubr.f32.gmra.mrb[0].mxu0 %v76
    %v155 = vpop.f32.mrb[0].mxu0
    %v156 = vadd.f32 0.0, %v155
    %v157 = vpop.f32.mrb[0].mxu0
    %158 = vmatprep.mubr.f32.mxu0 0.0
    %159 = vmatmul.mubr.f32.gmra.mrb[0].mxu0 %v79
    %v160 = vpop.f32.mrb[0].mxu0
    %v161 = vadd.f32 0.0, %v160
    %v162 = vpop.f32.mrb[0].mxu0
    %163 = vmatprep.mubr.f32.mxu0 0.0
    %164 = vmatmul.mubr.f32.gmra.mrb[0].mxu0 %v82
    %v165 = vpop.f32.mrb[0].mxu0
    %v166 = vadd.f32 0.0, %v165
    %v167 = vpop.f32.mrb[0].mxu0
    %168 = vdwg.mxu0
    %v169 = vadd.f32 %v151, %v156
    %v170 = vadd.f32 %v169, %v161
    %v171 = vadd.f32 %v170, %v166
    %v172 = vrot.slane %v171, 4
    %v173 = vadd.f32 %v171, %v172
    %v174 = vrot.slane %v173, 2
    %v175 = vadd.f32 %v173, %v174
    %v176 = vrot.slane %v175, 1
    %v177 = vadd.f32 %v175, %v176
    %v178 = vmul.f32 %v177, 0.03125
    %v179 = vsub.f32 %v151, %v178
    %v180 = vsub.f32 %v156, %v178
    %v181 = vsub.f32 %v161, %v178
    %v182 = vsub.f32 %v166, %v178
    %v183 = vmul.f32 %v179, %v179
    %v184 = vmul.f32 %v180, %v180
    %v185 = vmul.f32 %v181, %v181
    %v186 = vmul.f32 %v182, %v182
    %v187 = vadd.f32 %v183, %v184
    %v188 = vadd.f32 %v187, %v185
    %v189 = vadd.f32 %v188, %v186
    %v190 = vrot.slane %v189, 4
    %v191 = vadd.f32 %v189, %v190
    %v192 = vrot.slane %v191, 2
    %v193 = vadd.f32 %v191, %v192
    %v194 = vrot.slane %v193, 1
    %v195 = vadd.f32 %v193, %v194
    %v196 = vmul.f32 %v195, 0.03125
    %v197 = vld [vmem:[%s3] sm:$0x1]
    %v198 = vld [vmem:[%s3 + $0x1] sm:$0x1]
    %v199 = vld [vmem:[%s3 + $0x2] sm:$0x1]
    %v200 = vadd.f32 %v196, 1e-05
    %v201 = vrsqrt.pop %v200
    %v202 = vmul.f32 %v197, %v201
    %v203 = vlaneseq
    %v204 = vshrl.u32 %v203, 7
    %v205 = vsub.s32 0, %v204
    %v206 = vrot.slane %v202, %v205
    %v207 = vmul.f32 %v179, %v206
    %v208 = vmul.f32 %v180, %v206
    %v209 = vmul.f32 %v181, %v206
    %v210 = vmul.f32 %v182, %v206
    %v211 = vlaneseq
    %v212 = vshrl.u32 %v211, 7
    %v213 = vsub.s32 0, %v212
    %v214 = vrot.slane %v198, %v213
    %v215 = vadd.f32 %v207, %v214
    %v216 = vadd.f32 %v208, %v214
    %v217 = vadd.f32 %v209, %v214
    %v218 = vadd.f32 %v210, %v214
    %v219 = vmax.f32 %v215, 0.0
    %v220 = vmax.f32 %v216, 0.0
    %v221 = vmax.f32 %v217, 0.0
    %v222 = vmax.f32 %v218, 0.0
    %v223 = vld [vmem:[#allocation7] sm:$0xff]
    %v224 = vld [vmem:[#allocation7 + $0x8] sm:$0xff]
    %v225 = vld [vmem:[#allocation7 + $0x10] sm:$0xff]
    %v226 = vld [vmem:[#allocation7 + $0x18] sm:$0xff]
    %v227 = vld [vmem:[#allocation7 + $0x20] sm:$0xff]
    %v228 = vld [vmem:[#allocation7 + $0x28] sm:$0xff]
    %v229 = vld [vmem:[#allocation7 + $0x30] sm:$0xff]
    %v230 = vld [vmem:[#allocation7 + $0x38] sm:$0xff]
    %v231 = vld [vmem:[#allocation7 + $0x40] sm:$0xff]
    %v232 = vld [vmem:[#allocation7 + $0x48] sm:$0xff]
    %v233 = vld [vmem:[#allocation7 + $0x50] sm:$0xff]
    %v234 = vld [vmem:[#allocation7 + $0x58] sm:$0xff]
    %v235 = vld [vmem:[#allocation7 + $0x60] sm:$0xff]
    %v236 = vld [vmem:[#allocation7 + $0x68] sm:$0xff]
    %v237 = vld [vmem:[#allocation7 + $0x70] sm:$0xff]
    %v238 = vld [vmem:[#allocation7 + $0x78] sm:$0xff]
    %v239 = vlaneseq
    %v240 = vshrl.u32 %v239, 7
    %v241 = vsub.s32 0, %v240
    %v242 = vrot.slane %v199, %v241
    %243 = vmatprep.subr.mxu0 0.0
    %244 = vmatpush1.msra.mxu0 %v223
    %245 = vmatprep.subr.mxu0 0.0
    %246 = vmatpush1.msra.mxu0 %v224
    %247 = vmatprep.subr.mxu0 0.0
    %248 = vmatpush1.msra.mxu0 %v225
    %249 = vmatprep.subr.mxu0 0.0
    %250 = vmatpush1.msra.mxu0 %v226
    %251 = vmatprep.subr.mxu0 0.0
    %252 = vmatpush1.msra.mxu0 %v227
    %253 = vmatprep.subr.mxu0 0.0
    %254 = vmatpush1.msra.mxu0 %v228
    %255 = vmatprep.subr.mxu0 0.0
    %256 = vmatpush1.msra.mxu0 %v229
    %257 = vmatprep.subr.mxu0 0.0
    %258 = vmatpush1.msra.mxu0 %v230
    %259 = vmatprep.subr.mxu0 0.0
    %260 = vmatpush1.msra.mxu0 %v231
    %261 = vmatprep.subr.mxu0 0.0
    %262 = vmatpush1.msra.mxu0 %v232
    %263 = vmatprep.subr.mxu0 0.0
    %264 = vmatpush1.msra.mxu0 %v233
    %265 = vmatprep.subr.mxu0 0.0
    %266 = vmatpush1.msra.mxu0 %v234
    %267 = vmatprep.subr.mxu0 0.0
    %268 = vmatpush1.msra.mxu0 %v235
    %269 = vmatprep.subr.mxu0 0.0
    %270 = vmatpush1.msra.mxu0 %v236
    %271 = vmatprep.subr.mxu0 0.0
    %272 = vmatpush1.msra.mxu0 %v237
    %273 = vmatprep.subr.mxu0 0.0
    %274 = vmatpush1.msra.mxu0 %v238
    %275 = vmatprep.subr.mxu0 0.0
    %276 = vmatpush1.msra.mxu0 0.0
    %277 = vmatprep.subr.mxu0 0.0
    %278 = vmatpush1.msra.mxu0 0.0
    %279 = vmatprep.subr.mxu0 0.0
    %280 = vmatpush1.msra.mxu0 0.0
    %281 = vmatprep.subr.mxu0 0.0
    %282 = vmatpush1.msra.mxu0 0.0
    %283 = vmatprep.subr.mxu0 0.0
    %284 = vmatpush1.msra.mxu0 0.0
    %285 = vmatprep.subr.mxu0 0.0
    %286 = vmatpush1.msra.mxu0 0.0
    %287 = vmatprep.subr.mxu0 0.0
    %288 = vmatpush1.msra.mxu0 0.0
    %289 = vmatprep.subr.mxu0 0.0
    %290 = vmatpush1.msra.mxu0 0.0
    %291 = vmatprep.subr.mxu0 0.0
    %292 = vmatpush1.msra.mxu0 0.0
    %293 = vmatprep.subr.mxu0 0.0
    %294 = vmatpush1.msra.mxu0 0.0
    %295 = vmatprep.subr.mxu0 0.0
    %296 = vmatpush1.msra.mxu0 0.0
    %297 = vmatprep.subr.mxu0 0.0
    %298 = vmatpush1.msra.mxu0 0.0
    %299 = vmatprep.subr.mxu0 0.0
    %300 = vmatpush1.msra.mxu0 0.0
    %301 = vmatprep.subr.mxu0 0.0
    %302 = vmatpush1.msra.mxu0 0.0
    %303 = vmatprep.subr.mxu0 0.0
    %304 = vmatpush1.msra.mxu0 0.0
    %305 = vmatprep.subr.mxu0 0.0
    %306 = vmatpush1.msra.mxu0 0.0
    %307 = vmatprep.mubr.f32.mxu0 0.0
    %308 = vmatmul.mubr.f32.gmra.mrb[0].mxu0 %v219
    %v309 = vpop.f32.mrb[0].mxu0
    %v310 = vadd.f32 %v242, %v309
    %v311 = vpop.f32.mrb[0].mxu0
    %312 = vmatprep.mubr.f32.mxu0 0.0
    %313 = vmatmul.mubr.f32.gmra.mrb[0].mxu0 %v220
    %v314 = vpop.f32.mrb[0].mxu0
    %v315 = vadd.f32 %v242, %v314
    %v316 = vpop.f32.mrb[0].mxu0
    %317 = vmatprep.mubr.f32.mxu0 0.0
    %318 = vmatmul.mubr.f32.gmra.mrb[0].mxu0 %v221
    %v319 = vpop.f32.mrb[0].mxu0
    %v320 = vadd.f32 %v242, %v319
    %v321 = vpop.f32.mrb[0].mxu0
    %322 = vmatprep.mubr.f32.mxu0 0.0
    %323 = vmatmul.mubr.f32.gmra.mrb[0].mxu0 %v222
    %v324 = vpop.f32.mrb[0].mxu0
    %v325 = vadd.f32 %v242, %v324
    %v326 = vpop.f32.mrb[0].mxu0
    %327 = vdwg.mxu0
    %328 = vst [vmem:[#allocation8] sm:$0xff] %v310
    %329 = vst [vmem:[#allocation8 + $0x8] sm:$0xff] %v315
    %330 = vst [vmem:[#allocation8 + $0x10] sm:$0xff] %v320
    %331 = vst [vmem:[#allocation8 + $0x18] sm:$0xff] %v325
    // Predicated region
    $region30: #{tpu_custom_call.1} parent=1 // pred_check
      _
    $region31: #{tpu_custom_call.1} parent=1 // pred_check_branch
      %333 = sbr.rel (0) target = $region33
    $region32: #{tpu_custom_call.1} parent=1 // pred_region
      %s335 = ssub.s32 512, 512
      %336 = vsyncadd [#allocation4], %s335
      %s337 = sshll.u32 [#allocation8], 4
      %s338 = int_to_ptr.vmem [resolvable:$true] %s337
      %343 = dma.vmem_to_hbm [thread:$0]  %s338, 512, %s4, [#allocation4], 128, 128, 8
    $region33: #{tpu_custom_call.1} parent=1 // pred_fallthru
      _
    // Predicated region
    $region34: #{tpu_custom_call.1} parent=1 // pred_check
      _
    $region35: #{tpu_custom_call.1} parent=1 // pred_check_branch
      %345 = sbr.rel (0) target = $region37
    $region36: #{tpu_custom_call.1} parent=1 // pred_region
      %346 = dma.done [#allocation4], 512
    $region37: #{tpu_custom_call.1} parent=1 // pred_fallthru
      _
    %347 = vsyncpa [#allocation3], 1
    %348 = vsyncpa [#allocation6], 1
    %349 = vsyncpa [#allocation4], 1

</llo_original>
